<compile_context>
chip_gen: v5e
topology: v5e:2x2
jax: 0.10.0
libtpu: 0.0.40
codegen_flags: <defaults>
</compile_context>

<pallas_src>
import jax
import jax.numpy as jnp
from jax.experimental import pallas as pl
from jax.experimental.pallas import tpu as pltpu

EPS = 1e-5


def _mlp_kernel(x_ref,
                w1_ref, b1_ref,
                w2_ref, b2_ref,
                w3_ref, b3_ref,
                w4t_ref, b4_ref,
                o_ref):
    """One batch tile: 3x (Linear+ReLU, BN pre-folded) then lane-dense head."""

    def layer(h, w_ref, b_ref):
        # Matmul operands may be bf16; accumulate + elementwise in f32.
        lhs = h if h.dtype == w_ref.dtype else h.astype(w_ref.dtype)
        z = jnp.dot(lhs, w_ref[...],
                    preferred_element_type=jnp.float32) + b_ref[...]
        return jnp.maximum(z, 0.0)

    h = x_ref[...].astype(jnp.float32)          # (TB, F)
    h = layer(h, w1_ref, b1_ref)                # (TB, H1)
    h = layer(h, w2_ref, b2_ref)                # (TB, H2)
    h = layer(h, w3_ref, b3_ref)                # (TB, H3)

    # Final Linear(H3, 1) with BN3 folded in, produced directly as a lane-dense
    # (1, TB) row: contract the hidden dim of h against w4^T (1, H3).
    y = jnp.einsum('ok,tk->ot', w4t_ref[...], h,
                   preferred_element_type=jnp.float32)       # (1, TB)
    o_ref[...] = (y + b4_ref[...]).astype(o_ref.dtype)


def fold_batchnorm(params, eps=EPS):
    """Fold eval-mode BN (after ReLU_i) into Linear_{i+1}; returns 8 arrays."""
    (w1, b1, g1, be1, m1, v1,
     w2, b2, g2, be2, m2, v2,
     w3, b3, g3, be3, m3, v3,
     w4, b4) = params

    def bn_affine(g, be, m, v):
        scale = g * jax.lax.rsqrt(v + eps)          # (1, H)
        shift = be - m * scale                      # (1, H)
        return scale, shift

    s1, t1 = bn_affine(g1, be1, m1, v1)
    s2, t2 = bn_affine(g2, be2, m2, v2)
    s3, t3 = bn_affine(g3, be3, m3, v3)

    # relu(z)*s + t feeding Linear(W, b)  ==  relu(z) @ (s^T * W) + (t @ W + b)
    w2f = s1.T * w2
    b2f = t1 @ w2 + b2
    w3f = s2.T * w3
    b3f = t2 @ w3 + b3
    w4f = s3.T * w4                                  # (H3, 1)
    b4f = t3 @ w4 + b4                               # (1, 1)
    w4t = w4f.T                                      # (1, H3) for lane-dense head
    return w1, b1, w2f, b2f, w3f, b3f, w4t, b4f


def racing_predictor_forward(x, params, *, tb=None, matmul_dtype=jnp.float32):
    """x: (B, input_dim) f32. params: 20-tuple matching the PyTorch module."""
    B, F = x.shape
    w1, b1, w2, b2, w3, b3, w4t, b4 = fold_batchnorm(params)

    if matmul_dtype != jnp.float32:
        # bf16 operands for the MXU; biases / head weights / elementwise stay f32.
        w1 = w1.astype(matmul_dtype)
        w2 = w2.astype(matmul_dtype)
        w3 = w3.astype(matmul_dtype)

    # Batch tile: multiple of 128 (lane-dense output block alignment).  Large
    # enough to amortize the per-grid-step pipeline overhead, small enough that
    # the activation working set stays negligible in VMEM.
    if tb is None:
        tb = min(512, ((B + 127) // 128) * 128)
    tb = max(128, ((tb + 127) // 128) * 128)
    num_tiles = pl.cdiv(B, tb)
    b_pad = num_tiles * tb
    if b_pad != B:
        x = jnp.pad(x, ((0, b_pad - B), (0, 0)))     # tail tile padded, sliced below

    H1, H2, H3 = w1.shape[1], w2.shape[1], w3.shape[1]
    args = (x, w1, b1, w2, b2, w3, b3, w4t, b4)

    const2d = lambda i: (0, 0)                       # weights resident across steps
    in_specs = [pl.BlockSpec((tb, F), lambda i: (i, 0))] + [
        pl.BlockSpec(tuple(a.shape), const2d) for a in args[1:]
    ]
    out_specs = pl.BlockSpec((1, tb), lambda i: (0, i))   # lane-dense row slab

    flops = int(2 * b_pad * (F * H1 + H1 * H2 + H2 * H3 + H3))
    bytes_accessed = int(sum(a.size * a.dtype.itemsize for a in args) + b_pad * 4)

    out = pl.pallas_call(
        _mlp_kernel,
        out_shape=jax.ShapeDtypeStruct((1, b_pad), jnp.float32),
        grid=(num_tiles,),
        in_specs=in_specs,
        out_specs=out_specs,
        compiler_params=pltpu.CompilerParams(
            dimension_semantics=("parallel",),       # v7x: shard batch over 2 TCs
            vmem_limit_bytes=32 << 20,               # capped; footprint is tiny
        ),
        cost_estimate=pl.CostEstimate(
            flops=flops, transcendentals=0, bytes_accessed=bytes_accessed),
    )(*args)

    return out[0, :B].reshape(B, 1)


def init_params(key, input_dim, hidden_dims):
    """Deterministic synthetic parameters (shapes match the PyTorch module)."""
    params = []
    prev = input_dim
    for h in hidden_dims:
        key, kw, kb, kg, kbe, km, kv = jax.random.split(key, 7)
        scale = 1.0 / jnp.sqrt(jnp.float32(prev))
        w = jax.random.normal(kw, (prev, h), jnp.float32) * scale   # (in, out)
        b = jax.random.normal(kb, (1, h), jnp.float32) * 0.1
        gamma = 1.0 + 0.1 * jax.random.normal(kg, (1, h), jnp.float32)
        beta = 0.1 * jax.random.normal(kbe, (1, h), jnp.float32)
        mean = 0.1 * jax.random.normal(km, (1, h), jnp.float32)
        var = jnp.abs(jax.random.normal(kv, (1, h), jnp.float32)) + 0.5
        params.extend([w, b, gamma, beta, mean, var])
        prev = h
    key, kw, kb = jax.random.split(key, 3)
    scale = 1.0 / jnp.sqrt(jnp.float32(prev))
    w4 = jax.random.normal(kw, (prev, 1), jnp.float32) * scale
    b4 = jax.random.normal(kb, (1, 1), jnp.float32) * 0.1
    params.extend([w4, b4])
    return tuple(params)


def reference_forward(x, params):
    """Pure-JAX reference of the original (unfolded) eval-mode semantics."""
    p = list(params)
    h = x
    for i in range(3):
        w, b, g, be, m, v = p[i * 6:(i + 1) * 6]
        h = jnp.maximum(h @ w + b, 0.0)
        h = (h - m) * jax.lax.rsqrt(v + EPS) * g + be
    w4, b4 = p[18], p[19]
    return h @ w4 + b4


if __name__ == "__main__":
    INPUT_DIM = 32
    HIDDEN_DIMS = [128, 64, 32]
    BATCH = 200          # not a multiple of the tile -> exercises tail padding

    key = jax.random.PRNGKey(0)
    key, kx = jax.random.split(key)
    x = jax.random.normal(kx, (BATCH, INPUT_DIM), jnp.float32)
    params = init_params(key, INPUT_DIM, HIDDEN_DIMS)

    ref = reference_forward(x, params)

    # f32 matmul operands: tight check against the unfolded eval-mode reference.
    out = jax.block_until_ready(racing_predictor_forward(x, params))
    assert out.shape == (BATCH, 1), out.shape
    assert jnp.allclose(out, ref, atol=2e-4, rtol=2e-4), float(
        jnp.max(jnp.abs(out - ref)))

    # Also exercise the multi-tile path explicitly (tb=128 -> 2 grid steps).
    out_tiled = jax.block_until_ready(racing_predictor_forward(x, params, tb=128))
    assert jnp.allclose(out_tiled, ref, atol=2e-4, rtol=2e-4), float(
        jnp.max(jnp.abs(out_tiled - ref)))

    # bf16 matmul operands (native MXU rate on v6e/v7x), f32 accumulation and
    # f32 elementwise; looser tolerance because of the operand rounding.
    out_bf16 = jax.block_until_ready(
        racing_predictor_forward(x, params, matmul_dtype=jnp.bfloat16))
    assert out_bf16.shape == (BATCH, 1), out_bf16.shape
    assert jnp.allclose(out_bf16, ref, atol=1e-1, rtol=5e-2), float(
        jnp.max(jnp.abs(out_bf16 - ref)))

    print("KERNEL_OK")
</pallas_src>

<mosaic_0001>
module attributes {stable_mosaic.version = 11 : i64} {
  func.func @_mlp_kernel(%arg0: i32, %arg1: memref<256x32xf32, #tpu.memory_space<vmem>>, %arg2: memref<32x128xf32, #tpu.memory_space<vmem>>, %arg3: memref<1x128xf32, #tpu.memory_space<vmem>>, %arg4: memref<128x64xf32, #tpu.memory_space<vmem>>, %arg5: memref<1x64xf32, #tpu.memory_space<vmem>>, %arg6: memref<64x32xf32, #tpu.memory_space<vmem>>, %arg7: memref<1x32xf32, #tpu.memory_space<vmem>>, %arg8: memref<1x32xf32, #tpu.memory_space<vmem>>, %arg9: memref<1x1xf32, #tpu.memory_space<vmem>>, %arg10: memref<1x256xf32, #tpu.memory_space<vmem>>) attributes {dimension_semantics = [#tpu.dimension_semantics<parallel>], iteration_bounds = array<i64: 1>, scalar_prefetch = 0 : i64, scratch_operands = 0 : i64, tpu.core_type = #tpu.core_type<tc>, window_params = [{transform_indices = @transform_0, window_bounds = array<i64: 256, 32>}, {pipeline_mode = #tpu.pipeline_mode<synchronous>, transform_indices = @transform_1, window_bounds = array<i64: 32, 128>}, {pipeline_mode = #tpu.pipeline_mode<synchronous>, transform_indices = @transform_2, window_bounds = array<i64: 1, 128>}, {pipeline_mode = #tpu.pipeline_mode<synchronous>, transform_indices = @transform_3, window_bounds = array<i64: 128, 64>}, {pipeline_mode = #tpu.pipeline_mode<synchronous>, transform_indices = @transform_4, window_bounds = array<i64: 1, 64>}, {pipeline_mode = #tpu.pipeline_mode<synchronous>, transform_indices = @transform_5, window_bounds = array<i64: 64, 32>}, {pipeline_mode = #tpu.pipeline_mode<synchronous>, transform_indices = @transform_6, window_bounds = array<i64: 1, 32>}, {pipeline_mode = #tpu.pipeline_mode<synchronous>, transform_indices = @transform_7, window_bounds = array<i64: 1, 32>}, {pipeline_mode = #tpu.pipeline_mode<synchronous>, transform_indices = @transform_8, window_bounds = array<i64: 1, 1>}, {transform_indices = @transform_9, window_bounds = array<i64: 1, 256>}]} {
    %c0 = arith.constant 0 : index
    %c0_0 = arith.constant 0 : index
    %0 = vector.load %arg1[%c0, %c0_0] : memref<256x32xf32, #tpu.memory_space<vmem>>, vector<256x32xf32>
    %c0_1 = arith.constant 0 : index
    %c0_2 = arith.constant 0 : index
    %1 = vector.load %arg2[%c0_1, %c0_2] : memref<32x128xf32, #tpu.memory_space<vmem>>, vector<32x128xf32>
    %cst = arith.constant dense<0.000000e+00> : vector<256x128xf32>
    %2 = tpu.matmul %0, %1, %cst {dimension_numbers = #tpu.dot_dimension_numbers<[1], [0], [0], [1], [0, 0, 1, 1], [], []>} : vector<256x32xf32>, vector<32x128xf32>, vector<256x128xf32> -> vector<256x128xf32>
    %c0_3 = arith.constant 0 : index
    %c0_4 = arith.constant 0 : index
    %3 = vector.load %arg3[%c0_3, %c0_4] : memref<1x128xf32, #tpu.memory_space<vmem>>, vector<1x128xf32>
    %4 = vector.broadcast %3 : vector<1x128xf32> to vector<256x128xf32>
    %5 = arith.addf %2, %4 : vector<256x128xf32>
    %cst_5 = arith.constant 0.000000e+00 : f32
    %6 = vector.broadcast %cst_5 : f32 to vector<256x128xf32>
    %7 = arith.maximumf %5, %6 : vector<256x128xf32>
    %c0_6 = arith.constant 0 : index
    %c0_7 = arith.constant 0 : index
    %8 = vector.load %arg4[%c0_6, %c0_7] : memref<128x64xf32, #tpu.memory_space<vmem>>, vector<128x64xf32>
    %cst_8 = arith.constant dense<0.000000e+00> : vector<256x64xf32>
    %9 = tpu.matmul %7, %8, %cst_8 {dimension_numbers = #tpu.dot_dimension_numbers<[1], [0], [0], [1], [0, 0, 1, 1], [], []>} : vector<256x128xf32>, vector<128x64xf32>, vector<256x64xf32> -> vector<256x64xf32>
    %c0_9 = arith.constant 0 : index
    %c0_10 = arith.constant 0 : index
    %10 = vector.load %arg5[%c0_9, %c0_10] : memref<1x64xf32, #tpu.memory_space<vmem>>, vector<1x64xf32>
    %11 = vector.broadcast %10 : vector<1x64xf32> to vector<256x64xf32>
    %12 = arith.addf %9, %11 : vector<256x64xf32>
    %cst_11 = arith.constant 0.000000e+00 : f32
    %13 = vector.broadcast %cst_11 : f32 to vector<256x64xf32>
    %14 = arith.maximumf %12, %13 : vector<256x64xf32>
    %c0_12 = arith.constant 0 : index
    %c0_13 = arith.constant 0 : index
    %15 = vector.load %arg6[%c0_12, %c0_13] : memref<64x32xf32, #tpu.memory_space<vmem>>, vector<64x32xf32>
    %cst_14 = arith.constant dense<0.000000e+00> : vector<256x32xf32>
    %16 = tpu.matmul %14, %15, %cst_14 {dimension_numbers = #tpu.dot_dimension_numbers<[1], [0], [0], [1], [0, 0, 1, 1], [], []>} : vector<256x64xf32>, vector<64x32xf32>, vector<256x32xf32> -> vector<256x32xf32>
    %c0_15 = arith.constant 0 : index
    %c0_16 = arith.constant 0 : index
    %17 = vector.load %arg7[%c0_15, %c0_16] : memref<1x32xf32, #tpu.memory_space<vmem>>, vector<1x32xf32>
    %18 = vector.broadcast %17 : vector<1x32xf32> to vector<256x32xf32>
    %19 = arith.addf %16, %18 : vector<256x32xf32>
    %cst_17 = arith.constant 0.000000e+00 : f32
    %20 = vector.broadcast %cst_17 : f32 to vector<256x32xf32>
    %21 = arith.maximumf %19, %20 : vector<256x32xf32>
    %c0_18 = arith.constant 0 : index
    %c0_19 = arith.constant 0 : index
    %22 = vector.load %arg8[%c0_18, %c0_19] : memref<1x32xf32, #tpu.memory_space<vmem>>, vector<1x32xf32>
    "tpu.trace_start"() <{level = 10 : i32, message = "ok,tk->ot"}> : () -> ()
    %cst_20 = arith.constant dense<0.000000e+00> : vector<1x256xf32>
    %23 = tpu.matmul %22, %21, %cst_20 {dimension_numbers = #tpu.dot_dimension_numbers<[1], [1], [0], [0], [0, 0, 1, 0], [], []>} : vector<1x32xf32>, vector<256x32xf32>, vector<1x256xf32> -> vector<1x256xf32>
    "tpu.trace_stop"() : () -> ()
    %c0_21 = arith.constant 0 : index
    %c0_22 = arith.constant 0 : index
    %24 = vector.load %arg9[%c0_21, %c0_22] : memref<1x1xf32, #tpu.memory_space<vmem>>, vector<1x1xf32>
    %25 = vector.broadcast %24 : vector<1x1xf32> to vector<1x256xf32>
    %26 = arith.addf %23, %25 : vector<1x256xf32>
    %c0_23 = arith.constant 0 : index
    %c0_24 = arith.constant 0 : index
    %27 = vector.load %arg10[%c0_23, %c0_24] : memref<1x256xf32, #tpu.memory_space<vmem>>, vector<1x256xf32>
    tpu.vector_store %arg10[%c0_23, %c0_24], %26 {strides = array<i32>} : memref<1x256xf32, #tpu.memory_space<vmem>>, vector<1x256xf32>,
    return
  }
  func.func @transform_0(%arg0: i32) -> (i32, i32) {
    %c0_i32 = arith.constant 0 : i32
    %c0_i32_0 = arith.constant 0 : i32
    return %arg0, %c0_i32 : i32, i32
  }
  func.func @transform_1(%arg0: i32) -> (i32, i32) {
    %c0_i32 = arith.constant 0 : i32
    %c0_i32_0 = arith.constant 0 : i32
    %c0_i32_1 = arith.constant 0 : i32
    return %c0_i32, %c0_i32_0 : i32, i32
  }
  func.func @transform_2(%arg0: i32) -> (i32, i32) {
    %c0_i32 = arith.constant 0 : i32
    %c0_i32_0 = arith.constant 0 : i32
    %c0_i32_1 = arith.constant 0 : i32
    return %c0_i32, %c0_i32_0 : i32, i32
  }
  func.func @transform_3(%arg0: i32) -> (i32, i32) {
    %c0_i32 = arith.constant 0 : i32
    %c0_i32_0 = arith.constant 0 : i32
    %c0_i32_1 = arith.constant 0 : i32
    return %c0_i32, %c0_i32_0 : i32, i32
  }
  func.func @transform_4(%arg0: i32) -> (i32, i32) {
    %c0_i32 = arith.constant 0 : i32
    %c0_i32_0 = arith.constant 0 : i32
    %c0_i32_1 = arith.constant 0 : i32
    return %c0_i32, %c0_i32_0 : i32, i32
  }
  func.func @transform_5(%arg0: i32) -> (i32, i32) {
    %c0_i32 = arith.constant 0 : i32
    %c0_i32_0 = arith.constant 0 : i32
    %c0_i32_1 = arith.constant 0 : i32
    return %c0_i32, %c0_i32_0 : i32, i32
  }
  func.func @transform_6(%arg0: i32) -> (i32, i32) {
    %c0_i32 = arith.constant 0 : i32
    %c0_i32_0 = arith.constant 0 : i32
    %c0_i32_1 = arith.constant 0 : i32
    return %c0_i32, %c0_i32_0 : i32, i32
  }
  func.func @transform_7(%arg0: i32) -> (i32, i32) {
    %c0_i32 = arith.constant 0 : i32
    %c0_i32_0 = arith.constant 0 : i32
    %c0_i32_1 = arith.constant 0 : i32
    return %c0_i32, %c0_i32_0 : i32, i32
  }
  func.func @transform_8(%arg0: i32) -> (i32, i32) {
    %c0_i32 = arith.constant 0 : i32
    %c0_i32_0 = arith.constant 0 : i32
    %c0_i32_1 = arith.constant 0 : i32
    return %c0_i32, %c0_i32_0 : i32, i32
  }
  func.func @transform_9(%arg0: i32) -> (i32, i32) {
    %c0_i32 = arith.constant 0 : i32
    %c0_i32_0 = arith.constant 0 : i32
    return %c0_i32, %arg0 : i32, i32
  }
}

</mosaic_0001>

<llo_original>
// kernel: tpu_custom_call.1
$region0: #{tpu_custom_call.1}
  #allocation0 [shape = 'u32[]', space=smem, size = 0x4, offset = 0x4, fixed_abs, tag = 'smem constant byte address 0x4 - core index']
  #allocation1 [shape = 'u32[72,128]{1,0:T(1,128)}', space=vmem, size = 0x9000, scoped, tag = 'internal scratch']
  #allocation2 [shape = 'f32[1,1]{1,0:T(1,128)S(1)}', space=vmem, size = 0x200, scoped, tag = 'scoped memory for tpu_custom_call.1']
  %s0 = inlined_call_operand.vmem [shape: f32[256,32], index: 0, kind: input, shape index: {}]
  %s1 = inlined_call_operand.vmem [shape: f32[32,128], index: 1, kind: input, shape index: {}]
  %s2 = inlined_call_operand.vmem [shape: f32[1,128], index: 2, kind: input, shape index: {}]
  %s3 = inlined_call_operand.vmem [shape: f32[128,64], index: 3, kind: input, shape index: {}]
  %s4 = inlined_call_operand.vmem [shape: f32[1,64], index: 4, kind: input, shape index: {}]
  %s5 = inlined_call_operand.vmem [shape: f32[64,32], index: 5, kind: input, shape index: {}]
  %s6 = inlined_call_operand.vmem [shape: f32[1,32], index: 6, kind: input, shape index: {}]
  %s7 = inlined_call_operand.vmem [shape: f32[1,32], index: 7, kind: input, shape index: {}]
  %s8 = inlined_call_operand.<no memory space> [shape: f32[1,1], index: 8, kind: input, shape index: {}]
  %s9 = inlined_call_operand.hbm [shape: f32[1,256], index: 9, kind: output, shape index: {}]
  %s10 = sld [smem:[#allocation0]]
  $region46: #{tpu_custom_call.1} parent=0
    _
  %s12 = ssub.s32 1, %s10
  %s13 = scalar_select 0, %s12, %s10
  %v14 = vstv %s8
  %15 = vst [vmem:[#allocation2] sm:$0x1] %v14
  $region1: #{tpu_custom_call.1} parent=0
    #allocation3 [shape = 'u8[1024]{0}', space=vmem, size = 0x400, scoped, tag = 'output window, operand 0, single buffered']
    #allocation4 [shape = 's32[1]{0}', space=sflag, size = 0x4, scoped, tag = 'scoped memory for tpu_custom_call.1']
    %16 = vsyncpa [#allocation4], 0
    // Predicated region
    $region2: #{tpu_custom_call.1} parent=1 // pred_check
      _
    $region3: #{tpu_custom_call.1} parent=1 // pred_check_branch
      %18 = sbr.rel (0) target = $region5
    $region4: #{tpu_custom_call.1} parent=1 // pred_region
      _
    $region5: #{tpu_custom_call.1} parent=1 // pred_fallthru
      _
    // Predicated region
    $region6: #{tpu_custom_call.1} parent=1 // pred_check
      _
    $region7: #{tpu_custom_call.1} parent=1 // pred_check_branch
      %20 = sbr.rel (0) target = $region9
    $region8: #{tpu_custom_call.1} parent=1 // pred_region
      _
    $region9: #{tpu_custom_call.1} parent=1 // pred_fallthru
      _
    // Predicated region
    $region10: #{tpu_custom_call.1} parent=1 // pred_check
      _
    $region11: #{tpu_custom_call.1} parent=1 // pred_check_branch
      %22 = sbr.rel (0) target = $region13
    $region12: #{tpu_custom_call.1} parent=1 // pred_region
      _
    $region13: #{tpu_custom_call.1} parent=1 // pred_fallthru
      _
    // Predicated region
    $region14: #{tpu_custom_call.1} parent=1 // pred_check
      _
    $region15: #{tpu_custom_call.1} parent=1 // pred_check_branch
      %24 = sbr.rel (0) target = $region17
    $region16: #{tpu_custom_call.1} parent=1 // pred_region
      _
    $region17: #{tpu_custom_call.1} parent=1 // pred_fallthru
      _
    // Predicated region
    $region18: #{tpu_custom_call.1} parent=1 // pred_check
      _
    $region19: #{tpu_custom_call.1} parent=1 // pred_check_branch
      %26 = sbr.rel (0) target = $region21
    $region20: #{tpu_custom_call.1} parent=1 // pred_region
      _
    $region21: #{tpu_custom_call.1} parent=1 // pred_fallthru
      _
    // Predicated region
    $region22: #{tpu_custom_call.1} parent=1 // pred_check
      _
    $region23: #{tpu_custom_call.1} parent=1 // pred_check_branch
      %28 = sbr.rel (0) target = $region25
    $region24: #{tpu_custom_call.1} parent=1 // pred_region
      _
    $region25: #{tpu_custom_call.1} parent=1 // pred_fallthru
      _
    // Predicated region
    $region26: #{tpu_custom_call.1} parent=1 // pred_check
      _
    $region27: #{tpu_custom_call.1} parent=1 // pred_check_branch
      %30 = sbr.rel (0) target = $region29
    $region28: #{tpu_custom_call.1} parent=1 // pred_region
      _
    $region29: #{tpu_custom_call.1} parent=1 // pred_fallthru
      _
    // Predicated region
    $region30: #{tpu_custom_call.1} parent=1 // pred_check
      _
    $region31: #{tpu_custom_call.1} parent=1 // pred_check_branch
      %32 = sbr.rel (0) target = $region33
    $region32: #{tpu_custom_call.1} parent=1 // pred_region
      _
    $region33: #{tpu_custom_call.1} parent=1 // pred_fallthru
      _
    // Predicated region
    $region34: #{tpu_custom_call.1} parent=1 // pred_check
      _
    $region35: #{tpu_custom_call.1} parent=1 // pred_check_branch
      %34 = sbr.rel (0) target = $region37
    $region36: #{tpu_custom_call.1} parent=1 // pred_region
      _
    $region37: #{tpu_custom_call.1} parent=1 // pred_fallthru
      _
    %v35 = vld [vmem:[%s0] sm:$0xff]
    %v36 = vld [vmem:[%s0 + $0x8] sm:$0xff]
    %v37 = vld [vmem:[%s0 + $0x10] sm:$0xff]
    %v38 = vld [vmem:[%s0 + $0x18] sm:$0xff]
    %v39 = vld [vmem:[%s0 + $0x20] sm:$0xff]
    %v40 = vld [vmem:[%s0 + $0x28] sm:$0xff]
    %v41 = vld [vmem:[%s0 + $0x30] sm:$0xff]
    %v42 = vld [vmem:[%s0 + $0x38] sm:$0xff]
    %v43 = vld [vmem:[%s0 + $0x40] sm:$0xff]
    %v44 = vld [vmem:[%s0 + $0x48] sm:$0xff]
    %v45 = vld [vmem:[%s0 + $0x50] sm:$0xff]
    %v46 = vld [vmem:[%s0 + $0x58] sm:$0xff]
    %v47 = vld [vmem:[%s0 + $0x60] sm:$0xff]
    %v48 = vld [vmem:[%s0 + $0x68] sm:$0xff]
    %v49 = vld [vmem:[%s0 + $0x70] sm:$0xff]
    %v50 = vld [vmem:[%s0 + $0x78] sm:$0xff]
    %v51 = vld [vmem:[%s0 + $0x80] sm:$0xff]
    %v52 = vld [vmem:[%s0 + $0x88] sm:$0xff]
    %v53 = vld [vmem:[%s0 + $0x90] sm:$0xff]
    %v54 = vld [vmem:[%s0 + $0x98] sm:$0xff]
    %v55 = vld [vmem:[%s0 + $0xa0] sm:$0xff]
    %v56 = vld [vmem:[%s0 + $0xa8] sm:$0xff]
    %v57 = vld [vmem:[%s0 + $0xb0] sm:$0xff]
    %v58 = vld [vmem:[%s0 + $0xb8] sm:$0xff]
    %v59 = vld [vmem:[%s0 + $0xc0] sm:$0xff]
    %v60 = vld [vmem:[%s0 + $0xc8] sm:$0xff]
    %v61 = vld [vmem:[%s0 + $0xd0] sm:$0xff]
    %v62 = vld [vmem:[%s0 + $0xd8] sm:$0xff]
    %v63 = vld [vmem:[%s0 + $0xe0] sm:$0xff]
    %v64 = vld [vmem:[%s0 + $0xe8] sm:$0xff]
    %v65 = vld [vmem:[%s0 + $0xf0] sm:$0xff]
    %v66 = vld [vmem:[%s0 + $0xf8] sm:$0xff]
    %v67 = vld [vmem:[%s1] sm:$0xff]
    %v68 = vld [vmem:[%s1 + $0x8] sm:$0xff]
    %v69 = vld [vmem:[%s1 + $0x10] sm:$0xff]
    %v70 = vld [vmem:[%s1 + $0x18] sm:$0xff]
    %v71 = vld [vmem:[%s2] sm:$0x1]
    %v73 = vperm.slane %v71, 0
    %vm75 = vcmask 261120
    %v77 = vsel %vm75, %v35, 0
    %v80 = vsel %vm75, %v36, 0
    %v83 = vsel %vm75, %v37, 0
    %v86 = vsel %vm75, %v38, 0
    %v89 = vsel %vm75, %v39, 0
    %v92 = vsel %vm75, %v40, 0
    %v95 = vsel %vm75, %v41, 0
    %v98 = vsel %vm75, %v42, 0
    %v101 = vsel %vm75, %v43, 0
    %v104 = vsel %vm75, %v44, 0
    %v107 = vsel %vm75, %v45, 0
    %v110 = vsel %vm75, %v46, 0
    %v113 = vsel %vm75, %v47, 0
    %v116 = vsel %vm75, %v48, 0
    %v119 = vsel %vm75, %v49, 0
    %v122 = vsel %vm75, %v50, 0
    %v125 = vsel %vm75, %v51, 0
    %v128 = vsel %vm75, %v52, 0
    %v131 = vsel %vm75, %v53, 0
    %v134 = vsel %vm75, %v54, 0
    %v137 = vsel %vm75, %v55, 0
    %v140 = vsel %vm75, %v56, 0
    %v143 = vsel %vm75, %v57, 0
    %v146 = vsel %vm75, %v58, 0
    %v149 = vsel %vm75, %v59, 0
    %v152 = vsel %vm75, %v60, 0
    %v155 = vsel %vm75, %v61, 0
    %v158 = vsel %vm75, %v62, 0
    %v161 = vsel %vm75, %v63, 0
    %v164 = vsel %vm75, %v64, 0
    %v167 = vsel %vm75, %v65, 0
    %v170 = vsel %vm75, %v66, 0
    %172 = vmatpush.msra.mxu0 0.0
    %173 = vmatpush.msra.mxu0 0.0
    %174 = vmatpush.msra.mxu0 0.0
    %175 = vmatpush.msra.mxu0 0.0
    %176 = vmatpush.msra.mxu0 0.0
    %177 = vmatpush.msra.mxu0 0.0
    %178 = vmatpush.msra.mxu0 0.0
    %179 = vmatpush.msra.mxu0 0.0
    %180 = vmatpush.msra.mxu0 0.0
    %181 = vmatpush.msra.mxu0 0.0
    %182 = vmatpush.msra.mxu0 0.0
    %183 = vmatpush.msra.mxu0 0.0
    %184 = vmatpush.msra.mxu0 %v70
    %185 = vmatpush.msra.mxu0 %v69
    %186 = vmatpush.msra.mxu0 %v68
    %187 = vmatpush.msra.mxu0 %v67
    %188 = vmatmul.f32.gmra.mxu0 %v77
    %v189 = vpop.f32.mrf.mxu0
    %v190 = vadd.f32 %v73, %v189
    %191 = vmatmul.f32.gmra.mxu0 %v80
    %v192 = vpop.f32.mrf.mxu0
    %v193 = vadd.f32 %v73, %v192
    %194 = vmatmul.f32.gmra.mxu0 %v83
    %v195 = vpop.f32.mrf.mxu0
    %v196 = vadd.f32 %v73, %v195
    %197 = vmatmul.f32.gmra.mxu0 %v86
    %v198 = vpop.f32.mrf.mxu0
    %v199 = vadd.f32 %v73, %v198
    %200 = vmatmul.f32.gmra.mxu0 %v89
    %v201 = vpop.f32.mrf.mxu0
    %v202 = vadd.f32 %v73, %v201
    %203 = vmatmul.f32.gmra.mxu0 %v92
    %v204 = vpop.f32.mrf.mxu0
    %v205 = vadd.f32 %v73, %v204
    %206 = vmatmul.f32.gmra.mxu0 %v95
    %v207 = vpop.f32.mrf.mxu0
    %v208 = vadd.f32 %v73, %v207
    %209 = vmatmul.f32.gmra.mxu0 %v98
    %v210 = vpop.f32.mrf.mxu0
    %v211 = vadd.f32 %v73, %v210
    %212 = vmatmul.f32.gmra.mxu0 %v101
    %v213 = vpop.f32.mrf.mxu0
    %v214 = vadd.f32 %v73, %v213
    %215 = vmatmul.f32.gmra.mxu0 %v104
    %v216 = vpop.f32.mrf.mxu0
    %v217 = vadd.f32 %v73, %v216
    %218 = vmatmul.f32.gmra.mxu0 %v107
    %v219 = vpop.f32.mrf.mxu0
    %v220 = vadd.f32 %v73, %v219
    %221 = vmatmul.f32.gmra.mxu0 %v110
    %v222 = vpop.f32.mrf.mxu0
    %v223 = vadd.f32 %v73, %v222
    %224 = vmatmul.f32.gmra.mxu0 %v113
    %v225 = vpop.f32.mrf.mxu0
    %v226 = vadd.f32 %v73, %v225
    %227 = vmatmul.f32.gmra.mxu0 %v116
    %v228 = vpop.f32.mrf.mxu0
    %v229 = vadd.f32 %v73, %v228
    %230 = vmatmul.f32.gmra.mxu0 %v119
    %v231 = vpop.f32.mrf.mxu0
    %v232 = vadd.f32 %v73, %v231
    %233 = vmatmul.f32.gmra.mxu0 %v122
    %v234 = vpop.f32.mrf.mxu0
    %v235 = vadd.f32 %v73, %v234
    %236 = vmatmul.f32.gmra.mxu0 %v125
    %v237 = vpop.f32.mrf.mxu0
    %v238 = vadd.f32 %v73, %v237
    %239 = vmatmul.f32.gmra.mxu0 %v128
    %v240 = vpop.f32.mrf.mxu0
    %v241 = vadd.f32 %v73, %v240
    %242 = vmatmul.f32.gmra.mxu0 %v131
    %v243 = vpop.f32.mrf.mxu0
    %v244 = vadd.f32 %v73, %v243
    %245 = vmatmul.f32.gmra.mxu0 %v134
    %v246 = vpop.f32.mrf.mxu0
    %v247 = vadd.f32 %v73, %v246
    %248 = vmatmul.f32.gmra.mxu0 %v137
    %v249 = vpop.f32.mrf.mxu0
    %v250 = vadd.f32 %v73, %v249
    %251 = vmatmul.f32.gmra.mxu0 %v140
    %v252 = vpop.f32.mrf.mxu0
    %v253 = vadd.f32 %v73, %v252
    %254 = vmatmul.f32.gmra.mxu0 %v143
    %v255 = vpop.f32.mrf.mxu0
    %v256 = vadd.f32 %v73, %v255
    %257 = vmatmul.f32.gmra.mxu0 %v146
    %v258 = vpop.f32.mrf.mxu0
    %v259 = vadd.f32 %v73, %v258
    %260 = vmatmul.f32.gmra.mxu0 %v149
    %v261 = vpop.f32.mrf.mxu0
    %v262 = vadd.f32 %v73, %v261
    %263 = vmatmul.f32.gmra.mxu0 %v152
    %v264 = vpop.f32.mrf.mxu0
    %v265 = vadd.f32 %v73, %v264
    %266 = vmatmul.f32.gmra.mxu0 %v155
    %v267 = vpop.f32.mrf.mxu0
    %v268 = vadd.f32 %v73, %v267
    %269 = vmatmul.f32.gmra.mxu0 %v158
    %v270 = vpop.f32.mrf.mxu0
    %v271 = vadd.f32 %v73, %v270
    %272 = vmatmul.f32.gmra.mxu0 %v161
    %v273 = vpop.f32.mrf.mxu0
    %v274 = vadd.f32 %v73, %v273
    %275 = vmatmul.f32.gmra.mxu0 %v164
    %v276 = vpop.f32.mrf.mxu0
    %v277 = vadd.f32 %v73, %v276
    %278 = vmatmul.f32.gmra.mxu0 %v167
    %v279 = vpop.f32.mrf.mxu0
    %v280 = vadd.f32 %v73, %v279
    %281 = vmatmul.f32.gmra.mxu0 %v170
    %v282 = vpop.f32.mrf.mxu0
    %v283 = vadd.f32 %v73, %v282
    %284 = vdwg.mxu0
    %v285 = vmax.f32 %v190, 0.0
    %v286 = vmax.f32 %v193, 0.0
    %v287 = vmax.f32 %v196, 0.0
    %v288 = vmax.f32 %v199, 0.0
    %v289 = vmax.f32 %v202, 0.0
    %v290 = vmax.f32 %v205, 0.0
    %v291 = vmax.f32 %v208, 0.0
    %v292 = vmax.f32 %v211, 0.0
    %v293 = vmax.f32 %v214, 0.0
    %v294 = vmax.f32 %v217, 0.0
    %v295 = vmax.f32 %v220, 0.0
    %v296 = vmax.f32 %v223, 0.0
    %v297 = vmax.f32 %v226, 0.0
    %v298 = vmax.f32 %v229, 0.0
    %v299 = vmax.f32 %v232, 0.0
    %v300 = vmax.f32 %v235, 0.0
    %v301 = vmax.f32 %v238, 0.0
    %v302 = vmax.f32 %v241, 0.0
    %v303 = vmax.f32 %v244, 0.0
    %v304 = vmax.f32 %v247, 0.0
    %v305 = vmax.f32 %v250, 0.0
    %v306 = vmax.f32 %v253, 0.0
    %v307 = vmax.f32 %v256, 0.0
    %v308 = vmax.f32 %v259, 0.0
    %v309 = vmax.f32 %v262, 0.0
    %v310 = vmax.f32 %v265, 0.0
    %v311 = vmax.f32 %v268, 0.0
    %v312 = vmax.f32 %v271, 0.0
    %v313 = vmax.f32 %v274, 0.0
    %v314 = vmax.f32 %v277, 0.0
    %v315 = vmax.f32 %v280, 0.0
    %v316 = vmax.f32 %v283, 0.0
    %v317 = vld [vmem:[%s3] sm:$0xff]
    %v318 = vld [vmem:[%s3 + $0x8] sm:$0xff]
    %v319 = vld [vmem:[%s3 + $0x10] sm:$0xff]
    %v320 = vld [vmem:[%s3 + $0x18] sm:$0xff]
    %v321 = vld [vmem:[%s3 + $0x20] sm:$0xff]
    %v322 = vld [vmem:[%s3 + $0x28] sm:$0xff]
    %v323 = vld [vmem:[%s3 + $0x30] sm:$0xff]
    %v324 = vld [vmem:[%s3 + $0x38] sm:$0xff]
    %v325 = vld [vmem:[%s3 + $0x40] sm:$0xff]
    %v326 = vld [vmem:[%s3 + $0x48] sm:$0xff]
    %v327 = vld [vmem:[%s3 + $0x50] sm:$0xff]
    %v328 = vld [vmem:[%s3 + $0x58] sm:$0xff]
    %v329 = vld [vmem:[%s3 + $0x60] sm:$0xff]
    %v330 = vld [vmem:[%s3 + $0x68] sm:$0xff]
    %v331 = vld [vmem:[%s3 + $0x70] sm:$0xff]
    %v332 = vld [vmem:[%s3 + $0x78] sm:$0xff]
    %v333 = vld [vmem:[%s4] sm:$0x1]
    %v335 = vperm.slane %v333, 0
    %337 = vmatpush.msra.mxu0 %v332
    %338 = vmatpush.msra.mxu0 %v331
    %339 = vmatpush.msra.mxu0 %v330
    %340 = vmatpush.msra.mxu0 %v329
    %341 = vmatpush.msra.mxu0 %v328
    %342 = vmatpush.msra.mxu0 %v327
    %343 = vmatpush.msra.mxu0 %v326
    %344 = vmatpush.msra.mxu0 %v325
    %345 = vmatpush.msra.mxu0 %v324
    %346 = vmatpush.msra.mxu0 %v323
    %347 = vmatpush.msra.mxu0 %v322
    %348 = vmatpush.msra.mxu0 %v321
    %349 = vmatpush.msra.mxu0 %v320
    %350 = vmatpush.msra.mxu0 %v319
    %351 = vmatpush.msra.mxu0 %v318
    %352 = vmatpush.msra.mxu0 %v317
    %353 = vmatmul.f32.gmra.mxu0 %v285
    %v354 = vpop.f32.mrf.mxu0
    %v355 = vadd.f32 %v335, %v354
    %356 = vmatmul.f32.gmra.mxu0 %v286
    %v357 = vpop.f32.mrf.mxu0
    %v358 = vadd.f32 %v335, %v357
    %359 = vmatmul.f32.gmra.mxu0 %v287
    %v360 = vpop.f32.mrf.mxu0
    %v361 = vadd.f32 %v335, %v360
    %362 = vmatmul.f32.gmra.mxu0 %v288
    %v363 = vpop.f32.mrf.mxu0
    %v364 = vadd.f32 %v335, %v363
    %365 = vmatmul.f32.gmra.mxu0 %v289
    %v366 = vpop.f32.mrf.mxu0
    %v367 = vadd.f32 %v335, %v366
    %368 = vmatmul.f32.gmra.mxu0 %v290
    %v369 = vpop.f32.mrf.mxu0
    %v370 = vadd.f32 %v335, %v369
    %371 = vmatmul.f32.gmra.mxu0 %v291
    %v372 = vpop.f32.mrf.mxu0
    %v373 = vadd.f32 %v335, %v372
    %374 = vmatmul.f32.gmra.mxu0 %v292
    %v375 = vpop.f32.mrf.mxu0
    %v376 = vadd.f32 %v335, %v375
    %377 = vmatmul.f32.gmra.mxu0 %v293
    %v378 = vpop.f32.mrf.mxu0
    %v379 = vadd.f32 %v335, %v378
    %380 = vmatmul.f32.gmra.mxu0 %v294
    %v381 = vpop.f32.mrf.mxu0
    %v382 = vadd.f32 %v335, %v381
    %383 = vmatmul.f32.gmra.mxu0 %v295
    %v384 = vpop.f32.mrf.mxu0
    %v385 = vadd.f32 %v335, %v384
    %386 = vmatmul.f32.gmra.mxu0 %v296
    %v387 = vpop.f32.mrf.mxu0
    %v388 = vadd.f32 %v335, %v387
    %389 = vmatmul.f32.gmra.mxu0 %v297
    %v390 = vpop.f32.mrf.mxu0
    %v391 = vadd.f32 %v335, %v390
    %392 = vmatmul.f32.gmra.mxu0 %v298
    %v393 = vpop.f32.mrf.mxu0
    %v394 = vadd.f32 %v335, %v393
    %395 = vmatmul.f32.gmra.mxu0 %v299
    %v396 = vpop.f32.mrf.mxu0
    %v397 = vadd.f32 %v335, %v396
    %398 = vmatmul.f32.gmra.mxu0 %v300
    %v399 = vpop.f32.mrf.mxu0
    %v400 = vadd.f32 %v335, %v399
    %401 = vmatmul.f32.gmra.mxu0 %v301
    %v402 = vpop.f32.mrf.mxu0
    %v403 = vadd.f32 %v335, %v402
    %404 = vmatmul.f32.gmra.mxu0 %v302
    %v405 = vpop.f32.mrf.mxu0
    %v406 = vadd.f32 %v335, %v405
    %407 = vmatmul.f32.gmra.mxu0 %v303
    %v408 = vpop.f32.mrf.mxu0
    %v409 = vadd.f32 %v335, %v408
    %410 = vmatmul.f32.gmra.mxu0 %v304
    %v411 = vpop.f32.mrf.mxu0
    %v412 = vadd.f32 %v335, %v411
    %413 = vmatmul.f32.gmra.mxu0 %v305
    %v414 = vpop.f32.mrf.mxu0
    %v415 = vadd.f32 %v335, %v414
    %416 = vmatmul.f32.gmra.mxu0 %v306
    %v417 = vpop.f32.mrf.mxu0
    %v418 = vadd.f32 %v335, %v417
    %419 = vmatmul.f32.gmra.mxu0 %v307
    %v420 = vpop.f32.mrf.mxu0
    %v421 = vadd.f32 %v335, %v420
    %422 = vmatmul.f32.gmra.mxu0 %v308
    %v423 = vpop.f32.mrf.mxu0
    %v424 = vadd.f32 %v335, %v423
    %425 = vmatmul.f32.gmra.mxu0 %v309
    %v426 = vpop.f32.mrf.mxu0
    %v427 = vadd.f32 %v335, %v426
    %428 = vmatmul.f32.gmra.mxu0 %v310
    %v429 = vpop.f32.mrf.mxu0
    %v430 = vadd.f32 %v335, %v429
    %431 = vmatmul.f32.gmra.mxu0 %v311
    %v432 = vpop.f32.mrf.mxu0
    %v433 = vadd.f32 %v335, %v432
    %434 = vmatmul.f32.gmra.mxu0 %v312
    %v435 = vpop.f32.mrf.mxu0
    %v436 = vadd.f32 %v335, %v435
    %437 = vmatmul.f32.gmra.mxu0 %v313
    %v438 = vpop.f32.mrf.mxu0
    %v439 = vadd.f32 %v335, %v438
    %440 = vmatmul.f32.gmra.mxu0 %v314
    %v441 = vpop.f32.mrf.mxu0
    %v442 = vadd.f32 %v335, %v441
    %443 = vmatmul.f32.gmra.mxu0 %v315
    %v444 = vpop.f32.mrf.mxu0
    %v445 = vadd.f32 %v335, %v444
    %446 = vmatmul.f32.gmra.mxu0 %v316
    %v447 = vpop.f32.mrf.mxu0
    %v448 = vadd.f32 %v335, %v447
    %449 = vdwg.mxu0
    %v450 = vmax.f32 %v355, 0.0
    %v451 = vmax.f32 %v358, 0.0
    %v452 = vmax.f32 %v361, 0.0
    %v453 = vmax.f32 %v364, 0.0
    %v454 = vmax.f32 %v367, 0.0
    %v455 = vmax.f32 %v370, 0.0
    %v456 = vmax.f32 %v373, 0.0
    %v457 = vmax.f32 %v376, 0.0
    %v458 = vmax.f32 %v379, 0.0
    %v459 = vmax.f32 %v382, 0.0
    %v460 = vmax.f32 %v385, 0.0
    %v461 = vmax.f32 %v388, 0.0
    %v462 = vmax.f32 %v391, 0.0
    %v463 = vmax.f32 %v394, 0.0
    %v464 = vmax.f32 %v397, 0.0
    %v465 = vmax.f32 %v400, 0.0
    %v466 = vmax.f32 %v403, 0.0
    %v467 = vmax.f32 %v406, 0.0
    %v468 = vmax.f32 %v409, 0.0
    %v469 = vmax.f32 %v412, 0.0
    %v470 = vmax.f32 %v415, 0.0
    %v471 = vmax.f32 %v418, 0.0
    %v472 = vmax.f32 %v421, 0.0
    %v473 = vmax.f32 %v424, 0.0
    %v474 = vmax.f32 %v427, 0.0
    %v475 = vmax.f32 %v430, 0.0
    %v476 = vmax.f32 %v433, 0.0
    %v477 = vmax.f32 %v436, 0.0
    %v478 = vmax.f32 %v439, 0.0
    %v479 = vmax.f32 %v442, 0.0
    %v480 = vmax.f32 %v445, 0.0
    %v481 = vmax.f32 %v448, 0.0
    %v482 = vld [vmem:[%s5] sm:$0xff]
    %v483 = vld [vmem:[%s5 + $0x8] sm:$0xff]
    %v484 = vld [vmem:[%s5 + $0x10] sm:$0xff]
    %v485 = vld [vmem:[%s5 + $0x18] sm:$0xff]
    %v486 = vld [vmem:[%s5 + $0x20] sm:$0xff]
    %v487 = vld [vmem:[%s5 + $0x28] sm:$0xff]
    %v488 = vld [vmem:[%s5 + $0x30] sm:$0xff]
    %v489 = vld [vmem:[%s5 + $0x38] sm:$0xff]
    %v490 = vld [vmem:[%s6] sm:$0x1]
    %v492 = vperm.slane %v490, 0
    %vm494 = vcmask 523264
    %v496 = vsel %vm494, %v450, 0
    %v499 = vsel %vm494, %v451, 0
    %v502 = vsel %vm494, %v452, 0
    %v505 = vsel %vm494, %v453, 0
    %v508 = vsel %vm494, %v454, 0
    %v511 = vsel %vm494, %v455, 0
    %v514 = vsel %vm494, %v456, 0
    %v517 = vsel %vm494, %v457, 0
    %v520 = vsel %vm494, %v458, 0
    %v523 = vsel %vm494, %v459, 0
    %v526 = vsel %vm494, %v460, 0
    %v529 = vsel %vm494, %v461, 0
    %v532 = vsel %vm494, %v462, 0
    %v535 = vsel %vm494, %v463, 0
    %v538 = vsel %vm494, %v464, 0
    %v541 = vsel %vm494, %v465, 0
    %v544 = vsel %vm494, %v466, 0
    %v547 = vsel %vm494, %v467, 0
    %v550 = vsel %vm494, %v468, 0
    %v553 = vsel %vm494, %v469, 0
    %v556 = vsel %vm494, %v470, 0
    %v559 = vsel %vm494, %v471, 0
    %v562 = vsel %vm494, %v472, 0
    %v565 = vsel %vm494, %v473, 0
    %v568 = vsel %vm494, %v474, 0
    %v571 = vsel %vm494, %v475, 0
    %v574 = vsel %vm494, %v476, 0
    %v577 = vsel %vm494, %v477, 0
    %v580 = vsel %vm494, %v478, 0
    %v583 = vsel %vm494, %v479, 0
    %v586 = vsel %vm494, %v480, 0
    %v589 = vsel %vm494, %v481, 0
    %591 = vmatpush.msra.mxu0 0.0
    %592 = vmatpush.msra.mxu0 0.0
    %593 = vmatpush.msra.mxu0 0.0
    %594 = vmatpush.msra.mxu0 0.0
    %595 = vmatpush.msra.mxu0 0.0
    %596 = vmatpush.msra.mxu0 0.0
    %597 = vmatpush.msra.mxu0 0.0
    %598 = vmatpush.msra.mxu0 0.0
    %599 = vmatpush.msra.mxu0 %v489
    %600 = vmatpush.msra.mxu0 %v488
    %601 = vmatpush.msra.mxu0 %v487
    %602 = vmatpush.msra.mxu0 %v486
    %603 = vmatpush.msra.mxu0 %v485
    %604 = vmatpush.msra.mxu0 %v484
    %605 = vmatpush.msra.mxu0 %v483
    %606 = vmatpush.msra.mxu0 %v482
    %607 = vmatmul.f32.gmra.mxu0 %v496
    %v608 = vpop.f32.mrf.mxu0
    %v609 = vadd.f32 %v492, %v608
    %610 = vmatmul.f32.gmra.mxu0 %v499
    %v611 = vpop.f32.mrf.mxu0
    %v612 = vadd.f32 %v492, %v611
    %613 = vmatmul.f32.gmra.mxu0 %v502
    %v614 = vpop.f32.mrf.mxu0
    %v615 = vadd.f32 %v492, %v614
    %616 = vmatmul.f32.gmra.mxu0 %v505
    %v617 = vpop.f32.mrf.mxu0
    %v618 = vadd.f32 %v492, %v617
    %619 = vmatmul.f32.gmra.mxu0 %v508
    %v620 = vpop.f32.mrf.mxu0
    %v621 = vadd.f32 %v492, %v620
    %622 = vmatmul.f32.gmra.mxu0 %v511
    %v623 = vpop.f32.mrf.mxu0
    %v624 = vadd.f32 %v492, %v623
    %625 = vmatmul.f32.gmra.mxu0 %v514
    %v626 = vpop.f32.mrf.mxu0
    %v627 = vadd.f32 %v492, %v626
    %628 = vmatmul.f32.gmra.mxu0 %v517
    %v629 = vpop.f32.mrf.mxu0
    %v630 = vadd.f32 %v492, %v629
    %631 = vmatmul.f32.gmra.mxu0 %v520
    %v632 = vpop.f32.mrf.mxu0
    %v633 = vadd.f32 %v492, %v632
    %634 = vmatmul.f32.gmra.mxu0 %v523
    %v635 = vpop.f32.mrf.mxu0
    %v636 = vadd.f32 %v492, %v635
    %637 = vmatmul.f32.gmra.mxu0 %v526
    %v638 = vpop.f32.mrf.mxu0
    %v639 = vadd.f32 %v492, %v638
    %640 = vmatmul.f32.gmra.mxu0 %v529
    %v641 = vpop.f32.mrf.mxu0
    %v642 = vadd.f32 %v492, %v641
    %643 = vmatmul.f32.gmra.mxu0 %v532
    %v644 = vpop.f32.mrf.mxu0
    %v645 = vadd.f32 %v492, %v644
    %646 = vmatmul.f32.gmra.mxu0 %v535
    %v647 = vpop.f32.mrf.mxu0
    %v648 = vadd.f32 %v492, %v647
    %649 = vmatmul.f32.gmra.mxu0 %v538
    %v650 = vpop.f32.mrf.mxu0
    %v651 = vadd.f32 %v492, %v650
    %652 = vmatmul.f32.gmra.mxu0 %v541
    %v653 = vpop.f32.mrf.mxu0
    %v654 = vadd.f32 %v492, %v653
    %655 = vmatmul.f32.gmra.mxu0 %v544
    %v656 = vpop.f32.mrf.mxu0
    %v657 = vadd.f32 %v492, %v656
    %658 = vmatmul.f32.gmra.mxu0 %v547
    %v659 = vpop.f32.mrf.mxu0
    %v660 = vadd.f32 %v492, %v659
    %661 = vmatmul.f32.gmra.mxu0 %v550
    %v662 = vpop.f32.mrf.mxu0
    %v663 = vadd.f32 %v492, %v662
    %664 = vmatmul.f32.gmra.mxu0 %v553
    %v665 = vpop.f32.mrf.mxu0
    %v666 = vadd.f32 %v492, %v665
    %667 = vmatmul.f32.gmra.mxu0 %v556
    %v668 = vpop.f32.mrf.mxu0
    %v669 = vadd.f32 %v492, %v668
    %670 = vmatmul.f32.gmra.mxu0 %v559
    %v671 = vpop.f32.mrf.mxu0
    %v672 = vadd.f32 %v492, %v671
    %673 = vmatmul.f32.gmra.mxu0 %v562
    %v674 = vpop.f32.mrf.mxu0
    %v675 = vadd.f32 %v492, %v674
    %676 = vmatmul.f32.gmra.mxu0 %v565
    %v677 = vpop.f32.mrf.mxu0
    %v678 = vadd.f32 %v492, %v677
    %679 = vmatmul.f32.gmra.mxu0 %v568
    %v680 = vpop.f32.mrf.mxu0
    %v681 = vadd.f32 %v492, %v680
    %682 = vmatmul.f32.gmra.mxu0 %v571
    %v683 = vpop.f32.mrf.mxu0
    %v684 = vadd.f32 %v492, %v683
    %685 = vmatmul.f32.gmra.mxu0 %v574
    %v686 = vpop.f32.mrf.mxu0
    %v687 = vadd.f32 %v492, %v686
    %688 = vmatmul.f32.gmra.mxu0 %v577
    %v689 = vpop.f32.mrf.mxu0
    %v690 = vadd.f32 %v492, %v689
    %691 = vmatmul.f32.gmra.mxu0 %v580
    %v692 = vpop.f32.mrf.mxu0
    %v693 = vadd.f32 %v492, %v692
    %694 = vmatmul.f32.gmra.mxu0 %v583
    %v695 = vpop.f32.mrf.mxu0
    %v696 = vadd.f32 %v492, %v695
    %697 = vmatmul.f32.gmra.mxu0 %v586
    %v698 = vpop.f32.mrf.mxu0
    %v699 = vadd.f32 %v492, %v698
    %700 = vmatmul.f32.gmra.mxu0 %v589
    %v701 = vpop.f32.mrf.mxu0
    %v702 = vadd.f32 %v492, %v701
    %703 = vdwg.mxu0
    %v704 = vmax.f32 %v609, 0.0
    %v705 = vmax.f32 %v612, 0.0
    %v706 = vmax.f32 %v615, 0.0
    %v707 = vmax.f32 %v618, 0.0
    %v708 = vmax.f32 %v621, 0.0
    %v709 = vmax.f32 %v624, 0.0
    %v710 = vmax.f32 %v627, 0.0
    %v711 = vmax.f32 %v630, 0.0
    %v712 = vmax.f32 %v633, 0.0
    %v713 = vmax.f32 %v636, 0.0
    %v714 = vmax.f32 %v639, 0.0
    %v715 = vmax.f32 %v642, 0.0
    %v716 = vmax.f32 %v645, 0.0
    %v717 = vmax.f32 %v648, 0.0
    %v718 = vmax.f32 %v651, 0.0
    %v719 = vmax.f32 %v654, 0.0
    %v720 = vmax.f32 %v657, 0.0
    %v721 = vmax.f32 %v660, 0.0
    %v722 = vmax.f32 %v663, 0.0
    %v723 = vmax.f32 %v666, 0.0
    %v724 = vmax.f32 %v669, 0.0
    %v725 = vmax.f32 %v672, 0.0
    %v726 = vmax.f32 %v675, 0.0
    %v727 = vmax.f32 %v678, 0.0
    %v728 = vmax.f32 %v681, 0.0
    %v729 = vmax.f32 %v684, 0.0
    %v730 = vmax.f32 %v687, 0.0
    %v731 = vmax.f32 %v690, 0.0
    %v732 = vmax.f32 %v693, 0.0
    %v733 = vmax.f32 %v696, 0.0
    %v734 = vmax.f32 %v699, 0.0
    %v735 = vmax.f32 %v702, 0.0
    %v736 = vld [vmem:[%s7] sm:$0x1]
    %v737 = vld [vmem:[#allocation2] sm:$0x1]
    %739 = vset.pattern.permute.xlu0 0
    %740 = vperm.xlu0 %739, %v737
    %v741 = vpop.permute.xlu0 %740
    %v743 = vperm.slane %v741, 0
    %v745 = vsel %vm75, %v736, 0
    %v748 = vsel %vm75, %v704, 0
    %v751 = vsel %vm75, %v705, 0
    %v754 = vsel %vm75, %v706, 0
    %v757 = vsel %vm75, %v707, 0
    %v760 = vsel %vm75, %v708, 0
    %v763 = vsel %vm75, %v709, 0
    %v766 = vsel %vm75, %v710, 0
    %v769 = vsel %vm75, %v711, 0
    %v772 = vsel %vm75, %v712, 0
    %v775 = vsel %vm75, %v713, 0
    %v778 = vsel %vm75, %v714, 0
    %v781 = vsel %vm75, %v715, 0
    %v784 = vsel %vm75, %v716, 0
    %v787 = vsel %vm75, %v717, 0
    %v790 = vsel %vm75, %v718, 0
    %v793 = vsel %vm75, %v719, 0
    %v796 = vsel %vm75, %v720, 0
    %v799 = vsel %vm75, %v721, 0
    %v802 = vsel %vm75, %v722, 0
    %v805 = vsel %vm75, %v723, 0
    %v808 = vsel %vm75, %v724, 0
    %v811 = vsel %vm75, %v725, 0
    %v814 = vsel %vm75, %v726, 0
    %v817 = vsel %vm75, %v727, 0
    %v820 = vsel %vm75, %v728, 0
    %v823 = vsel %vm75, %v729, 0
    %v826 = vsel %vm75, %v730, 0
    %v829 = vsel %vm75, %v731, 0
    %v832 = vsel %vm75, %v732, 0
    %v835 = vsel %vm75, %v733, 0
    %v838 = vsel %vm75, %v734, 0
    %v841 = vsel %vm75, %v735, 0
    %843 = vmatpush.xpose.msra.mxu0 %v793
    %844 = vmatpush.xpose.msra.mxu0 %v790
    %845 = vmatpush.xpose.msra.mxu0 %v787
    %846 = vmatpush.xpose.msra.mxu0 %v784
    %847 = vmatpush.xpose.msra.mxu0 %v781
    %848 = vmatpush.xpose.msra.mxu0 %v778
    %849 = vmatpush.xpose.msra.mxu0 %v775
    %850 = vmatpush.xpose.msra.mxu0 %v772
    %851 = vmatpush.xpose.msra.mxu0 %v769
    %852 = vmatpush.xpose.msra.mxu0 %v766
    %853 = vmatpush.xpose.msra.mxu0 %v763
    %854 = vmatpush.xpose.msra.mxu0 %v760
    %855 = vmatpush.xpose.msra.mxu0 %v757
    %856 = vmatpush.xpose.msra.mxu0 %v754
    %857 = vmatpush.xpose.msra.mxu0 %v751
    %858 = vmatpush.xpose.msra.mxu0 %v748
    %859 = vmatmul.f32.gmra.mxu0 %v745
    %v860 = vpop.f32.mrf.mxu0
    %v861 = vadd.f32 %v743, %v860
    %862 = vdwg.mxu0
    %863 = vmatpush.xpose.msra.mxu0 %v841
    %864 = vmatpush.xpose.msra.mxu0 %v838
    %865 = vmatpush.xpose.msra.mxu0 %v835
    %866 = vmatpush.xpose.msra.mxu0 %v832
    %867 = vmatpush.xpose.msra.mxu0 %v829
    %868 = vmatpush.xpose.msra.mxu0 %v826
    %869 = vmatpush.xpose.msra.mxu0 %v823
    %870 = vmatpush.xpose.msra.mxu0 %v820
    %871 = vmatpush.xpose.msra.mxu0 %v817
    %872 = vmatpush.xpose.msra.mxu0 %v814
    %873 = vmatpush.xpose.msra.mxu0 %v811
    %874 = vmatpush.xpose.msra.mxu0 %v808
    %875 = vmatpush.xpose.msra.mxu0 %v805
    %876 = vmatpush.xpose.msra.mxu0 %v802
    %877 = vmatpush.xpose.msra.mxu0 %v799
    %878 = vmatpush.xpose.msra.mxu0 %v796
    %879 = vmatmul.f32.gmra.mxu0 %v745
    %v880 = vpop.f32.mrf.mxu0
    %v881 = vadd.f32 %v743, %v880
    %882 = vdwg.mxu0
    %v885 = vrot.slane %v881, 7
    %vm886 = vcmask 1040384
    %v887 = vsel %vm886, %v861, %v885
    %v889 = vlaneseq
    %vm890 = vcmp.ge.s32.totalorder %v889, 0
    %vm891 = vcmp.lt.s32.totalorder %v889, 256
    %vm892 = vmand %vm890, %vm891
    %893 = vst.msk [vmem:[#allocation3] sm:$0x3] %vm892, %v887
    // Predicated region
    $region38: #{tpu_custom_call.1} parent=1 // pred_check
      _
    $region39: #{tpu_custom_call.1} parent=1 // pred_check_branch
      %895 = sbr.rel (0) target = $region41
    $region40: #{tpu_custom_call.1} parent=1 // pred_region
      %897 = vsyncadd [#allocation4], 0
      %s899 = sshll.u32 [#allocation3], 4
      %s900 = int_to_ptr.vmem [resolvable:$true] %s899
      %s901 = sshll.u32 %s9, 4
      %s902 = int_to_ptr.hbm [resolvable:$true] %s901
      %904 = dma.vmem_to_hbm [thread:$0]  %s900, 32, %s902, [#allocation4]
    $region41: #{tpu_custom_call.1} parent=1 // pred_fallthru
      _
    // Predicated region
    $region42: #{tpu_custom_call.1} parent=1 // pred_check
      _
    $region43: #{tpu_custom_call.1} parent=1 // pred_check_branch
      %906 = sbr.rel (0) target = $region45
    $region44: #{tpu_custom_call.1} parent=1 // pred_region
      %908 = dma.done [#allocation4], 32
    $region45: #{tpu_custom_call.1} parent=1 // pred_fallthru
      _
    %909 = vsyncpa [#allocation4], 1

</llo_original>
